<compile_context>
chip_gen: v5e
topology: v5e:2x2
jax: 0.10.0
libtpu: 0.0.40
codegen_flags: <defaults>
</compile_context>

<pallas_src>
import functools

import jax
import jax.numpy as jnp
import numpy as np
from jax.experimental import pallas as pl
from jax.experimental.pallas import tpu as pltpu

# ----- small, module-consistent shapes -----
MODALITIES = ("FLAIR", "T1wCE")          # subset of ('FLAIR','T1wCE','T1w','T2w')
M = len(MODALITIES)
N = 2                                    # batch
C, H, W = 4, 16, 16                      # NCHW image per modality
F_IN = C * H * W                         # 1024
PRE_OUT = 64                             # pre_output_size (scaled down from 512)
EMBRACE = 128                            # embracement_size (scaled down from 256)
N_CLASSES = 2
OUT_PAD = 128                            # lane-dense padded output width


def multimodal_kernel(xcat_ref, wbb_ref, bbb_ref, wdcat_ref, bdcat_ref,
                      wcat_ref, bcat_ref, avail_ref, out_ref, *, batch, n_mod):
    """Fused backbone + docking + attention-embracement + post head.

    xcat_ref  : (M*batch, F_IN)       bf16  modality-m rows are [m*batch, (m+1)*batch)
    wbb_ref   : (F_IN, PRE_OUT)       bf16  shared backbone weight
    bbb_ref   : (1, PRE_OUT)          f32
    wdcat_ref : (PRE_OUT, M*EMBRACE)  bf16  modality-m docking weight = lane block m
    bdcat_ref : (1, M*EMBRACE)        f32
    wcat_ref  : (EMBRACE, OUT_PAD)    bf16  [wp | wa | zero pad]  fused scorer+post
    bcat_ref  : (1, OUT_PAD)          f32   [bp | ba | zero pad]
    avail_ref : (batch, M)            f32   modality availability (1 = available)
    out_ref   : (batch, OUT_PAD)      f32   lanes [0, N_CLASSES) hold the logits
    """
    # Shared backbone over ALL modality rows in one MXU push (bf16 in, f32 acc).
    z = jnp.dot(xcat_ref[...], wbb_ref[...],
                preferred_element_type=jnp.float32) + bbb_ref[...]
    z = jnp.maximum(z, 0.0)                                   # (M*batch, PRE_OUT) f32

    # All per-modality docking layers in one MXU push; only the diagonal
    # (row-block m, lane-block m) pieces are used below.
    d_all = jnp.dot(z.astype(wdcat_ref.dtype), wdcat_ref[...],
                    preferred_element_type=jnp.float32) + bdcat_ref[...]
    d_all = jnp.maximum(d_all, 0.0)                           # (M*batch, M*EMBRACE) f32

    wcat = wcat_ref[...]
    bcat = bcat_ref[...]

    sys_m, scores = [], []
    for m in range(n_mod):                                    # static & small
        d_m = d_all[m * batch:(m + 1) * batch,
                    m * EMBRACE:(m + 1) * EMBRACE]            # (batch, EMBRACE)
        # fused [post-logits | attention-score] for this modality
        sy = jnp.dot(d_m.astype(wcat.dtype), wcat,
                     preferred_element_type=jnp.float32) + bcat   # (batch, OUT_PAD)
        s = sy[:, N_CLASSES:N_CLASSES + 1]                        # (batch, 1) f32
        s = jnp.where(avail_ref[:, m:m + 1] > 0.0, s, -1e30)      # mask in f32 path
        sys_m.append(sy)
        scores.append(s)

    # masked softmax over the modality axis (static lists; no lane-1 concats)
    s_max = scores[0]
    for m in range(1, n_mod):
        s_max = jnp.maximum(s_max, scores[m])
    exps = [jnp.exp(s - s_max) for s in scores]
    denom = exps[0]
    for m in range(1, n_mod):
        denom = denom + exps[m]
    inv_denom = pl.reciprocal(denom, approx=True)             # EUP slot

    # Embracement expectation.  Since sum_m p_m == 1 the fused post bias bp is
    # carried through exactly once:  out = sum_m p_m*(d_m@wp + bp) = emb@wp + bp.
    out = (exps[0] * inv_denom) * sys_m[0]
    for m in range(1, n_mod):
        out = out + (exps[m] * inv_denom) * sys_m[m]
    out_ref[...] = out                                        # lane-dense store


def init_params(key):
    ks = jax.random.split(key, 4)

    def sc(fan_in):
        return 1.0 / np.sqrt(fan_in)

    return {
        "wbb": jax.random.normal(ks[0], (F_IN, PRE_OUT), jnp.float32) * sc(F_IN),
        "bbb": jnp.zeros((1, PRE_OUT), jnp.float32),
        "wd": jax.random.normal(ks[1], (M, PRE_OUT, EMBRACE), jnp.float32) * sc(PRE_OUT),
        "bd": jnp.zeros((M, 1, EMBRACE), jnp.float32),
        "wa": jax.random.normal(ks[2], (EMBRACE, 1), jnp.float32) * sc(EMBRACE),
        "ba": jnp.zeros((1, 1), jnp.float32),
        "wp": jax.random.normal(ks[3], (EMBRACE, N_CLASSES), jnp.float32) * sc(EMBRACE),
        "bp": jnp.zeros((1, N_CLASSES), jnp.float32),
    }


def multimodal_forward(x_dict, params):
    keys = sorted(x_dict)                                     # matches `sorted(x)`
    n_mod = len(keys)
    batch = x_dict[keys[0]].shape[0]

    # flatten each NCHW modality and concatenate along rows -> (M*batch, F_IN)
    xs = [x_dict[k].reshape(batch, -1) for k in keys]
    xcat = jnp.concatenate(xs, axis=0).astype(jnp.bfloat16)

    # fold per-modality docking weights into one lane-blocked matrix
    wdcat = jnp.transpose(params["wd"], (1, 0, 2)).reshape(PRE_OUT, n_mod * EMBRACE)
    bdcat = params["bd"].reshape(1, n_mod * EMBRACE)

    # fuse the attention scorer with the post head: [wp | wa | zero pad]
    wcat = jnp.zeros((EMBRACE, OUT_PAD), jnp.float32)
    wcat = wcat.at[:, :N_CLASSES].set(params["wp"])
    wcat = wcat.at[:, N_CLASSES].set(params["wa"][:, 0])
    bcat = jnp.zeros((1, OUT_PAD), jnp.float32)
    bcat = bcat.at[:, :N_CLASSES].set(params["bp"])
    bcat = bcat.at[:, N_CLASSES].set(params["ba"][0])

    # deterministic path: dropout branch not taken -> all modalities available
    avail = jnp.ones((batch, n_mod), jnp.float32)

    args = (xcat,
            params["wbb"].astype(jnp.bfloat16), params["bbb"],
            wdcat.astype(jnp.bfloat16), bdcat,
            wcat.astype(jnp.bfloat16), bcat,
            avail)

    kernel = functools.partial(multimodal_kernel, batch=batch, n_mod=n_mod)
    out_pad = pl.pallas_call(
        kernel,
        out_shape=jax.ShapeDtypeStruct((batch, OUT_PAD), jnp.float32),
        in_specs=[pl.BlockSpec(memory_space=pltpu.MemorySpace.VMEM)] * len(args),
        out_specs=pl.BlockSpec(memory_space=pltpu.MemorySpace.VMEM),
    )(*args)
    return out_pad[:, :N_CLASSES]


def reference_forward(x_dict, params, avail=None):
    """Pure-JAX reference; mirrors the kernel's bf16-MXU / f32-elementwise mix."""
    keys = sorted(x_dict)
    n_mod = len(keys)
    batch = x_dict[keys[0]].shape[0]
    if avail is None:
        avail = jnp.ones((batch, n_mod), jnp.float32)
    bf = jnp.bfloat16
    wbb = params["wbb"].astype(bf)
    wa = params["wa"].astype(bf)
    wp = params["wp"].astype(bf)

    ys, scores = [], []
    for m, k in enumerate(keys):
        xm = x_dict[k].reshape(batch, -1).astype(bf)
        z = jnp.dot(xm, wbb, preferred_element_type=jnp.float32) + params["bbb"]
        z = jnp.maximum(z, 0.0)
        d = jnp.dot(z.astype(bf), params["wd"][m].astype(bf),
                    preferred_element_type=jnp.float32) + params["bd"][m]
        d = jnp.maximum(d, 0.0)
        s = jnp.dot(d.astype(bf), wa, preferred_element_type=jnp.float32) + params["ba"]
        s = jnp.where(avail[:, m:m + 1] > 0.0, s, -1e30)
        y = jnp.dot(d.astype(bf), wp, preferred_element_type=jnp.float32) + params["bp"]
        scores.append(s)
        ys.append(y)

    p = jax.nn.softmax(jnp.concatenate(scores, axis=-1), axis=-1)   # (batch, M)
    return sum(p[:, m:m + 1] * ys[m] for m in range(n_mod))


if __name__ == "__main__":
    key = jax.random.PRNGKey(0)
    kp, *kxs = jax.random.split(key, 1 + M)
    params = init_params(kp)

    # deterministic example inputs: dict of modality -> (N, C, H, W) NCHW
    x = {mod: jax.random.normal(kxs[i], (N, C, H, W), jnp.float32)
         for i, mod in enumerate(MODALITIES)}

    pred = multimodal_forward(x, params)
    pred = jax.block_until_ready(pred)

    ref = reference_forward(x, params)
    assert pred.shape == (N, N_CLASSES)
    np.testing.assert_allclose(np.asarray(pred), np.asarray(ref),
                               rtol=1e-2, atol=1e-2)
    print("KERNEL_OK")
</pallas_src>

<mosaic_0001>
module attributes {stable_mosaic.version = 11 : i64} {
  func.func @multimodal_kernel(%arg0: memref<4x1024xbf16, #tpu.memory_space<vmem>>, %arg1: memref<1024x64xbf16, #tpu.memory_space<vmem>>, %arg2: memref<1x64xf32, #tpu.memory_space<vmem>>, %arg3: memref<64x256xbf16, #tpu.memory_space<vmem>>, %arg4: memref<1x256xf32, #tpu.memory_space<vmem>>, %arg5: memref<128x128xbf16, #tpu.memory_space<vmem>>, %arg6: memref<1x128xf32, #tpu.memory_space<vmem>>, %arg7: memref<2x2xf32, #tpu.memory_space<vmem>>, %arg8: memref<2x128xf32, #tpu.memory_space<vmem>>) attributes {dimension_semantics = [], scalar_prefetch = 0 : i64, scratch_operands = 0 : i64, tpu.core_type = #tpu.core_type<tc>} {
    %c0 = arith.constant 0 : index
    %c0_0 = arith.constant 0 : index
    %0 = vector.load %arg0[%c0, %c0_0] : memref<4x1024xbf16, #tpu.memory_space<vmem>>, vector<4x1024xbf16>
    %c0_1 = arith.constant 0 : index
    %c0_2 = arith.constant 0 : index
    %1 = vector.load %arg1[%c0_1, %c0_2] : memref<1024x64xbf16, #tpu.memory_space<vmem>>, vector<1024x64xbf16>
    %cst = arith.constant dense<0.000000e+00> : vector<4x64xf32>
    %2 = tpu.matmul %0, %1, %cst {dimension_numbers = #tpu.dot_dimension_numbers<[1], [0], [0], [1], [0, 0, 1, 1], [], []>} : vector<4x1024xbf16>, vector<1024x64xbf16>, vector<4x64xf32> -> vector<4x64xf32>
    %c0_3 = arith.constant 0 : index
    %c0_4 = arith.constant 0 : index
    %3 = vector.load %arg2[%c0_3, %c0_4] : memref<1x64xf32, #tpu.memory_space<vmem>>, vector<1x64xf32>
    %4 = vector.broadcast %3 : vector<1x64xf32> to vector<4x64xf32>
    %5 = arith.addf %2, %4 : vector<4x64xf32>
    %cst_5 = arith.constant 0.000000e+00 : f32
    %6 = vector.broadcast %cst_5 : f32 to vector<4x64xf32>
    %7 = arith.maximumf %5, %6 : vector<4x64xf32>
    %8 = arith.truncf %7 : vector<4x64xf32> to vector<4x64xbf16>
    %c0_6 = arith.constant 0 : index
    %c0_7 = arith.constant 0 : index
    %9 = vector.load %arg3[%c0_6, %c0_7] : memref<64x256xbf16, #tpu.memory_space<vmem>>, vector<64x256xbf16>
    %cst_8 = arith.constant dense<0.000000e+00> : vector<4x256xf32>
    %10 = tpu.matmul %8, %9, %cst_8 {dimension_numbers = #tpu.dot_dimension_numbers<[1], [0], [0], [1], [0, 0, 1, 1], [], []>} : vector<4x64xbf16>, vector<64x256xbf16>, vector<4x256xf32> -> vector<4x256xf32>
    %c0_9 = arith.constant 0 : index
    %c0_10 = arith.constant 0 : index
    %11 = vector.load %arg4[%c0_9, %c0_10] : memref<1x256xf32, #tpu.memory_space<vmem>>, vector<1x256xf32>
    %12 = vector.broadcast %11 : vector<1x256xf32> to vector<4x256xf32>
    %13 = arith.addf %10, %12 : vector<4x256xf32>
    %cst_11 = arith.constant 0.000000e+00 : f32
    %14 = vector.broadcast %cst_11 : f32 to vector<4x256xf32>
    %15 = arith.maximumf %13, %14 : vector<4x256xf32>
    %c0_12 = arith.constant 0 : index
    %c0_13 = arith.constant 0 : index
    %16 = vector.load %arg5[%c0_12, %c0_13] : memref<128x128xbf16, #tpu.memory_space<vmem>>, vector<128x128xbf16>
    %c0_14 = arith.constant 0 : index
    %c0_15 = arith.constant 0 : index
    %17 = vector.load %arg6[%c0_14, %c0_15] : memref<1x128xf32, #tpu.memory_space<vmem>>, vector<1x128xf32>
    %18 = vector.extract_strided_slice %15 {offsets = [0, 0], sizes = [2, 128], strides = [1, 1]} : vector<4x256xf32> to vector<2x128xf32>
    %19 = arith.truncf %18 : vector<2x128xf32> to vector<2x128xbf16>
    %cst_16 = arith.constant dense<0.000000e+00> : vector<2x128xf32>
    %20 = tpu.matmul %19, %16, %cst_16 {dimension_numbers = #tpu.dot_dimension_numbers<[1], [0], [0], [1], [0, 0, 1, 1], [], []>} : vector<2x128xbf16>, vector<128x128xbf16>, vector<2x128xf32> -> vector<2x128xf32>
    %21 = vector.broadcast %17 : vector<1x128xf32> to vector<2x128xf32>
    %22 = arith.addf %20, %21 : vector<2x128xf32>
    %23 = vector.extract_strided_slice %22 {offsets = [0, 2], sizes = [2, 1], strides = [1, 1]} : vector<2x128xf32> to vector<2x1xf32>
    %c0_17 = arith.constant 0 : index
    %c0_18 = arith.constant 0 : index
    %24 = vector.load %arg7[%c0_17, %c0_18] : memref<2x2xf32, #tpu.memory_space<vmem>>, vector<2x1xf32>
    %cst_19 = arith.constant 0.000000e+00 : f32
    %25 = vector.broadcast %cst_19 : f32 to vector<2x1xf32>
    %26 = arith.cmpf ogt, %24, %25 : vector<2x1xf32>
    %cst_20 = arith.constant -1.000000e+30 : f32
    %27 = vector.broadcast %cst_20 : f32 to vector<2x1xf32>
    %28 = arith.select %26, %23, %27 : vector<2x1xi1>, vector<2x1xf32>
    %29 = vector.extract_strided_slice %15 {offsets = [2, 128], sizes = [2, 128], strides = [1, 1]} : vector<4x256xf32> to vector<2x128xf32>
    %30 = arith.truncf %29 : vector<2x128xf32> to vector<2x128xbf16>
    %cst_21 = arith.constant dense<0.000000e+00> : vector<2x128xf32>
    %31 = tpu.matmul %30, %16, %cst_21 {dimension_numbers = #tpu.dot_dimension_numbers<[1], [0], [0], [1], [0, 0, 1, 1], [], []>} : vector<2x128xbf16>, vector<128x128xbf16>, vector<2x128xf32> -> vector<2x128xf32>
    %32 = vector.broadcast %17 : vector<1x128xf32> to vector<2x128xf32>
    %33 = arith.addf %31, %32 : vector<2x128xf32>
    %34 = vector.extract_strided_slice %33 {offsets = [0, 2], sizes = [2, 1], strides = [1, 1]} : vector<2x128xf32> to vector<2x1xf32>
    %c0_22 = arith.constant 0 : index
    %c1 = arith.constant 1 : index
    %35 = vector.load %arg7[%c0_22, %c1] : memref<2x2xf32, #tpu.memory_space<vmem>>, vector<2x1xf32>
    %cst_23 = arith.constant 0.000000e+00 : f32
    %36 = vector.broadcast %cst_23 : f32 to vector<2x1xf32>
    %37 = arith.cmpf ogt, %35, %36 : vector<2x1xf32>
    %cst_24 = arith.constant -1.000000e+30 : f32
    %38 = vector.broadcast %cst_24 : f32 to vector<2x1xf32>
    %39 = arith.select %37, %34, %38 : vector<2x1xi1>, vector<2x1xf32>
    %40 = arith.maximumf %28, %39 : vector<2x1xf32>
    %41 = arith.subf %28, %40 : vector<2x1xf32>
    %42 = math.exp %41 : vector<2x1xf32>
    %43 = arith.subf %39, %40 : vector<2x1xf32>
    %44 = math.exp %43 : vector<2x1xf32>
    %45 = arith.addf %42, %44 : vector<2x1xf32>
    %46 = tpu.reciprocal %45 {approx = true} : vector<2x1xf32> -> vector<2x1xf32>
    %47 = arith.mulf %42, %46 : vector<2x1xf32>
    %48 = vector.broadcast %47 : vector<2x1xf32> to vector<2x128xf32>
    %49 = arith.mulf %48, %22 : vector<2x128xf32>
    %50 = arith.mulf %44, %46 : vector<2x1xf32>
    %51 = vector.broadcast %50 : vector<2x1xf32> to vector<2x128xf32>
    %52 = arith.mulf %51, %33 : vector<2x128xf32>
    %53 = arith.addf %49, %52 : vector<2x128xf32>
    %c0_25 = arith.constant 0 : index
    %c0_26 = arith.constant 0 : index
    %54 = vector.load %arg8[%c0_25, %c0_26] : memref<2x128xf32, #tpu.memory_space<vmem>>, vector<2x128xf32>
    tpu.vector_store %arg8[%c0_25, %c0_26], %53 {strides = array<i32>} : memref<2x128xf32, #tpu.memory_space<vmem>>, vector<2x128xf32>,
    return
  }
}

</mosaic_0001>

<llo_original>
// kernel: tpu_custom_call.1
$region0: #{tpu_custom_call.1}
  #allocation0 [shape = 'u32[]', space=smem, size = 0x4, offset = 0x4, fixed_abs, tag = 'smem constant byte address 0x4 - core index']
  #allocation1 [shape = 'u32[72,128]{1,0:T(1,128)}', space=vmem, size = 0x9000, scoped, tag = 'internal scratch']
  %s0 = inlined_call_operand.vmem [shape: bf16[4,1024], index: 0, kind: input, shape index: {}]
  %s1 = inlined_call_operand.vmem [shape: bf16[1024,64], index: 1, kind: input, shape index: {}]
  %s2 = inlined_call_operand.vmem [shape: f32[1,64], index: 2, kind: input, shape index: {}]
  %s3 = inlined_call_operand.vmem [shape: bf16[64,256], index: 3, kind: input, shape index: {}]
  %s4 = inlined_call_operand.vmem [shape: f32[1,256], index: 4, kind: input, shape index: {}]
  %s5 = inlined_call_operand.vmem [shape: bf16[128,128], index: 5, kind: input, shape index: {}]
  %s6 = inlined_call_operand.vmem [shape: f32[1,128], index: 6, kind: input, shape index: {}]
  %s7 = inlined_call_operand.vmem [shape: f32[2,2], index: 7, kind: input, shape index: {}]
  %s8 = inlined_call_operand.hbm [shape: f32[2,128], index: 8, kind: output, shape index: {}]
  %s9 = sld [smem:[#allocation0]]
  $region42: #{tpu_custom_call.1} parent=0
    _
  %s11 = ssub.s32 1, %s9
  %s12 = scalar_select 0, %s11, %s9
  $region1: #{tpu_custom_call.1} parent=0
    #allocation2 [shape = 'u8[1024]{0}', space=vmem, size = 0x400, scoped, tag = 'output window, operand 0, single buffered']
    #allocation3 [shape = 's32[1]{0}', space=sflag, size = 0x4, scoped, tag = 'scoped memory for tpu_custom_call.1']
    %13 = vsyncpa [#allocation3], 0
    // Predicated region
    $region2: #{tpu_custom_call.1} parent=1 // pred_check
      _
    $region3: #{tpu_custom_call.1} parent=1 // pred_check_branch
      %15 = sbr.rel (0) target = $region5
    $region4: #{tpu_custom_call.1} parent=1 // pred_region
      _
    $region5: #{tpu_custom_call.1} parent=1 // pred_fallthru
      _
    // Predicated region
    $region6: #{tpu_custom_call.1} parent=1 // pred_check
      _
    $region7: #{tpu_custom_call.1} parent=1 // pred_check_branch
      %17 = sbr.rel (0) target = $region9
    $region8: #{tpu_custom_call.1} parent=1 // pred_region
      _
    $region9: #{tpu_custom_call.1} parent=1 // pred_fallthru
      _
    // Predicated region
    $region10: #{tpu_custom_call.1} parent=1 // pred_check
      _
    $region11: #{tpu_custom_call.1} parent=1 // pred_check_branch
      %19 = sbr.rel (0) target = $region13
    $region12: #{tpu_custom_call.1} parent=1 // pred_region
      _
    $region13: #{tpu_custom_call.1} parent=1 // pred_fallthru
      _
    // Predicated region
    $region14: #{tpu_custom_call.1} parent=1 // pred_check
      _
    $region15: #{tpu_custom_call.1} parent=1 // pred_check_branch
      %21 = sbr.rel (0) target = $region17
    $region16: #{tpu_custom_call.1} parent=1 // pred_region
      _
    $region17: #{tpu_custom_call.1} parent=1 // pred_fallthru
      _
    // Predicated region
    $region18: #{tpu_custom_call.1} parent=1 // pred_check
      _
    $region19: #{tpu_custom_call.1} parent=1 // pred_check_branch
      %23 = sbr.rel (0) target = $region21
    $region20: #{tpu_custom_call.1} parent=1 // pred_region
      _
    $region21: #{tpu_custom_call.1} parent=1 // pred_fallthru
      _
    // Predicated region
    $region22: #{tpu_custom_call.1} parent=1 // pred_check
      _
    $region23: #{tpu_custom_call.1} parent=1 // pred_check_branch
      %25 = sbr.rel (0) target = $region25
    $region24: #{tpu_custom_call.1} parent=1 // pred_region
      _
    $region25: #{tpu_custom_call.1} parent=1 // pred_fallthru
      _
    // Predicated region
    $region26: #{tpu_custom_call.1} parent=1 // pred_check
      _
    $region27: #{tpu_custom_call.1} parent=1 // pred_check_branch
      %27 = sbr.rel (0) target = $region29
    $region28: #{tpu_custom_call.1} parent=1 // pred_region
      _
    $region29: #{tpu_custom_call.1} parent=1 // pred_fallthru
      _
    // Predicated region
    $region30: #{tpu_custom_call.1} parent=1 // pred_check
      _
    $region31: #{tpu_custom_call.1} parent=1 // pred_check_branch
      %29 = sbr.rel (0) target = $region33
    $region32: #{tpu_custom_call.1} parent=1 // pred_region
      _
    $region33: #{tpu_custom_call.1} parent=1 // pred_fallthru
      _
    %v31 = vld [vmem:[%s0] sm:$0xff]
    %v32 = vld [vmem:[%s0 + $0x8] sm:$0xff]
    %v33 = vld [vmem:[%s1] sm:$0xf]
    %v34 = vld [vmem:[%s1 + $0x4] sm:$0xf]
    %v35 = vld [vmem:[%s1 + $0x8] sm:$0xf]
    %v36 = vld [vmem:[%s1 + $0xc] sm:$0xf]
    %v37 = vld [vmem:[%s1 + $0x10] sm:$0xf]
    %v38 = vld [vmem:[%s1 + $0x14] sm:$0xf]
    %v39 = vld [vmem:[%s1 + $0x18] sm:$0xf]
    %v40 = vld [vmem:[%s1 + $0x1c] sm:$0xf]
    %v41 = vld [vmem:[%s1 + $0x20] sm:$0xf]
    %v42 = vld [vmem:[%s1 + $0x24] sm:$0xf]
    %v43 = vld [vmem:[%s1 + $0x28] sm:$0xf]
    %v44 = vld [vmem:[%s1 + $0x2c] sm:$0xf]
    %v45 = vld [vmem:[%s1 + $0x30] sm:$0xf]
    %v46 = vld [vmem:[%s1 + $0x34] sm:$0xf]
    %v47 = vld [vmem:[%s1 + $0x38] sm:$0xf]
    %v48 = vld [vmem:[%s1 + $0x3c] sm:$0xf]
    %v49 = vld [vmem:[%s1 + $0x40] sm:$0xf]
    %v50 = vld [vmem:[%s1 + $0x44] sm:$0xf]
    %v51 = vld [vmem:[%s1 + $0x48] sm:$0xf]
    %v52 = vld [vmem:[%s1 + $0x4c] sm:$0xf]
    %v53 = vld [vmem:[%s1 + $0x50] sm:$0xf]
    %v54 = vld [vmem:[%s1 + $0x54] sm:$0xf]
    %v55 = vld [vmem:[%s1 + $0x58] sm:$0xf]
    %v56 = vld [vmem:[%s1 + $0x5c] sm:$0xf]
    %v57 = vld [vmem:[%s1 + $0x60] sm:$0xf]
    %v58 = vld [vmem:[%s1 + $0x64] sm:$0xf]
    %v59 = vld [vmem:[%s1 + $0x68] sm:$0xf]
    %v60 = vld [vmem:[%s1 + $0x6c] sm:$0xf]
    %v61 = vld [vmem:[%s1 + $0x70] sm:$0xf]
    %v62 = vld [vmem:[%s1 + $0x74] sm:$0xf]
    %v63 = vld [vmem:[%s1 + $0x78] sm:$0xf]
    %v64 = vld [vmem:[%s1 + $0x7c] sm:$0xf]
    %v65 = vld [vmem:[%s1 + $0x80] sm:$0xf]
    %v66 = vld [vmem:[%s1 + $0x84] sm:$0xf]
    %v67 = vld [vmem:[%s1 + $0x88] sm:$0xf]
    %v68 = vld [vmem:[%s1 + $0x8c] sm:$0xf]
    %v69 = vld [vmem:[%s1 + $0x90] sm:$0xf]
    %v70 = vld [vmem:[%s1 + $0x94] sm:$0xf]
    %v71 = vld [vmem:[%s1 + $0x98] sm:$0xf]
    %v72 = vld [vmem:[%s1 + $0x9c] sm:$0xf]
    %v73 = vld [vmem:[%s1 + $0xa0] sm:$0xf]
    %v74 = vld [vmem:[%s1 + $0xa4] sm:$0xf]
    %v75 = vld [vmem:[%s1 + $0xa8] sm:$0xf]
    %v76 = vld [vmem:[%s1 + $0xac] sm:$0xf]
    %v77 = vld [vmem:[%s1 + $0xb0] sm:$0xf]
    %v78 = vld [vmem:[%s1 + $0xb4] sm:$0xf]
    %v79 = vld [vmem:[%s1 + $0xb8] sm:$0xf]
    %v80 = vld [vmem:[%s1 + $0xbc] sm:$0xf]
    %v81 = vld [vmem:[%s1 + $0xc0] sm:$0xf]
    %v82 = vld [vmem:[%s1 + $0xc4] sm:$0xf]
    %v83 = vld [vmem:[%s1 + $0xc8] sm:$0xf]
    %v84 = vld [vmem:[%s1 + $0xcc] sm:$0xf]
    %v85 = vld [vmem:[%s1 + $0xd0] sm:$0xf]
    %v86 = vld [vmem:[%s1 + $0xd4] sm:$0xf]
    %v87 = vld [vmem:[%s1 + $0xd8] sm:$0xf]
    %v88 = vld [vmem:[%s1 + $0xdc] sm:$0xf]
    %v89 = vld [vmem:[%s1 + $0xe0] sm:$0xf]
    %v90 = vld [vmem:[%s1 + $0xe4] sm:$0xf]
    %v91 = vld [vmem:[%s1 + $0xe8] sm:$0xf]
    %v92 = vld [vmem:[%s1 + $0xec] sm:$0xf]
    %v93 = vld [vmem:[%s1 + $0xf0] sm:$0xf]
    %v94 = vld [vmem:[%s1 + $0xf4] sm:$0xf]
    %v95 = vld [vmem:[%s1 + $0xf8] sm:$0xf]
    %v96 = vld [vmem:[%s1 + $0xfc] sm:$0xf]
    %v97 = vld [vmem:[%s1 + $0x100] sm:$0xf]
    %v98 = vld [vmem:[%s1 + $0x104] sm:$0xf]
    %v99 = vld [vmem:[%s1 + $0x108] sm:$0xf]
    %v100 = vld [vmem:[%s1 + $0x10c] sm:$0xf]
    %v101 = vld [vmem:[%s1 + $0x110] sm:$0xf]
    %v102 = vld [vmem:[%s1 + $0x114] sm:$0xf]
    %v103 = vld [vmem:[%s1 + $0x118] sm:$0xf]
    %v104 = vld [vmem:[%s1 + $0x11c] sm:$0xf]
    %v105 = vld [vmem:[%s1 + $0x120] sm:$0xf]
    %v106 = vld [vmem:[%s1 + $0x124] sm:$0xf]
    %v107 = vld [vmem:[%s1 + $0x128] sm:$0xf]
    %v108 = vld [vmem:[%s1 + $0x12c] sm:$0xf]
    %v109 = vld [vmem:[%s1 + $0x130] sm:$0xf]
    %v110 = vld [vmem:[%s1 + $0x134] sm:$0xf]
    %v111 = vld [vmem:[%s1 + $0x138] sm:$0xf]
    %v112 = vld [vmem:[%s1 + $0x13c] sm:$0xf]
    %v113 = vld [vmem:[%s1 + $0x140] sm:$0xf]
    %v114 = vld [vmem:[%s1 + $0x144] sm:$0xf]
    %v115 = vld [vmem:[%s1 + $0x148] sm:$0xf]
    %v116 = vld [vmem:[%s1 + $0x14c] sm:$0xf]
    %v117 = vld [vmem:[%s1 + $0x150] sm:$0xf]
    %v118 = vld [vmem:[%s1 + $0x154] sm:$0xf]
    %v119 = vld [vmem:[%s1 + $0x158] sm:$0xf]
    %v120 = vld [vmem:[%s1 + $0x15c] sm:$0xf]
    %v121 = vld [vmem:[%s1 + $0x160] sm:$0xf]
    %v122 = vld [vmem:[%s1 + $0x164] sm:$0xf]
    %v123 = vld [vmem:[%s1 + $0x168] sm:$0xf]
    %v124 = vld [vmem:[%s1 + $0x16c] sm:$0xf]
    %v125 = vld [vmem:[%s1 + $0x170] sm:$0xf]
    %v126 = vld [vmem:[%s1 + $0x174] sm:$0xf]
    %v127 = vld [vmem:[%s1 + $0x178] sm:$0xf]
    %v128 = vld [vmem:[%s1 + $0x17c] sm:$0xf]
    %v129 = vld [vmem:[%s1 + $0x180] sm:$0xf]
    %v130 = vld [vmem:[%s1 + $0x184] sm:$0xf]
    %v131 = vld [vmem:[%s1 + $0x188] sm:$0xf]
    %v132 = vld [vmem:[%s1 + $0x18c] sm:$0xf]
    %v133 = vld [vmem:[%s1 + $0x190] sm:$0xf]
    %v134 = vld [vmem:[%s1 + $0x194] sm:$0xf]
    %v135 = vld [vmem:[%s1 + $0x198] sm:$0xf]
    %v136 = vld [vmem:[%s1 + $0x19c] sm:$0xf]
    %v137 = vld [vmem:[%s1 + $0x1a0] sm:$0xf]
    %v138 = vld [vmem:[%s1 + $0x1a4] sm:$0xf]
    %v139 = vld [vmem:[%s1 + $0x1a8] sm:$0xf]
    %v140 = vld [vmem:[%s1 + $0x1ac] sm:$0xf]
    %v141 = vld [vmem:[%s1 + $0x1b0] sm:$0xf]
    %v142 = vld [vmem:[%s1 + $0x1b4] sm:$0xf]
    %v143 = vld [vmem:[%s1 + $0x1b8] sm:$0xf]
    %v144 = vld [vmem:[%s1 + $0x1bc] sm:$0xf]
    %v145 = vld [vmem:[%s1 + $0x1c0] sm:$0xf]
    %v146 = vld [vmem:[%s1 + $0x1c4] sm:$0xf]
    %v147 = vld [vmem:[%s1 + $0x1c8] sm:$0xf]
    %v148 = vld [vmem:[%s1 + $0x1cc] sm:$0xf]
    %v149 = vld [vmem:[%s1 + $0x1d0] sm:$0xf]
    %v150 = vld [vmem:[%s1 + $0x1d4] sm:$0xf]
    %v151 = vld [vmem:[%s1 + $0x1d8] sm:$0xf]
    %v152 = vld [vmem:[%s1 + $0x1dc] sm:$0xf]
    %v153 = vld [vmem:[%s1 + $0x1e0] sm:$0xf]
    %v154 = vld [vmem:[%s1 + $0x1e4] sm:$0xf]
    %v155 = vld [vmem:[%s1 + $0x1e8] sm:$0xf]
    %v156 = vld [vmem:[%s1 + $0x1ec] sm:$0xf]
    %v157 = vld [vmem:[%s1 + $0x1f0] sm:$0xf]
    %v158 = vld [vmem:[%s1 + $0x1f4] sm:$0xf]
    %v159 = vld [vmem:[%s1 + $0x1f8] sm:$0xf]
    %v160 = vld [vmem:[%s1 + $0x1fc] sm:$0xf]
    %v161 = vld [vmem:[%s2] sm:$0x1]
    %v163 = vperm.slane %v161, 0
    %166 = vst [vmem:[#allocation1] ss:$4 sm:$0xff] %v31
    %s168 = scalar_lea.vmem [#allocation1], 32
    %169 = vst [vmem:[%s168] ss:$4 sm:$0xff] %v32
    %v170 = vld.sshfl [vmem:[#allocation1] sm:$0xff pattern:$0x73625140]
    %v171 = vld.sshfl [vmem:[#allocation1 + $0x8] sm:$0xff pattern:$0x73625140]
    %v172 = vld.sshfl [vmem:[#allocation1 + $0x10] sm:$0xff pattern:$0x73625140]
    %v173 = vld.sshfl [vmem:[#allocation1 + $0x18] sm:$0xff pattern:$0x73625140]
    %v174 = vld.sshfl [vmem:[#allocation1 + $0x20] sm:$0xff pattern:$0x73625140]
    %v175 = vld.sshfl [vmem:[#allocation1 + $0x28] sm:$0xff pattern:$0x73625140]
    %v176 = vld.sshfl [vmem:[#allocation1 + $0x30] sm:$0xff pattern:$0x73625140]
    %v177 = vld.sshfl [vmem:[#allocation1 + $0x38] sm:$0xff pattern:$0x73625140]
    %v314 = vunpack.c.l.b16 %v33
    %v315 = vunpack.c.l.b16 %v34
    %v316 = vunpack.c.l.b16 %v35
    %v317 = vunpack.c.l.b16 %v36
    %v318 = vunpack.c.l.b16 %v37
    %v319 = vunpack.c.l.b16 %v38
    %v320 = vunpack.c.l.b16 %v39
    %v321 = vunpack.c.l.b16 %v40
    %v322 = vunpack.c.l.b16 %v41
    %v323 = vunpack.c.l.b16 %v42
    %v324 = vunpack.c.l.b16 %v43
    %v325 = vunpack.c.l.b16 %v44
    %v326 = vunpack.c.l.b16 %v45
    %v327 = vunpack.c.l.b16 %v46
    %v328 = vunpack.c.l.b16 %v47
    %v329 = vunpack.c.l.b16 %v48
    %v330 = vunpack.c.l.b16 %v49
    %v331 = vunpack.c.l.b16 %v50
    %v332 = vunpack.c.l.b16 %v51
    %v333 = vunpack.c.l.b16 %v52
    %v334 = vunpack.c.l.b16 %v53
    %v335 = vunpack.c.l.b16 %v54
    %v336 = vunpack.c.l.b16 %v55
    %v337 = vunpack.c.l.b16 %v56
    %v338 = vunpack.c.l.b16 %v57
    %v339 = vunpack.c.l.b16 %v58
    %v340 = vunpack.c.l.b16 %v59
    %v341 = vunpack.c.l.b16 %v60
    %v342 = vunpack.c.l.b16 %v61
    %v343 = vunpack.c.l.b16 %v62
    %v344 = vunpack.c.l.b16 %v63
    %v345 = vunpack.c.l.b16 %v64
    %v346 = vunpack.c.l.b16 %v65
    %v347 = vunpack.c.l.b16 %v66
    %v348 = vunpack.c.l.b16 %v67
    %v349 = vunpack.c.l.b16 %v68
    %v350 = vunpack.c.l.b16 %v69
    %v351 = vunpack.c.l.b16 %v70
    %v352 = vunpack.c.l.b16 %v71
    %v353 = vunpack.c.l.b16 %v72
    %v354 = vunpack.c.l.b16 %v73
    %v355 = vunpack.c.l.b16 %v74
    %v356 = vunpack.c.l.b16 %v75
    %v357 = vunpack.c.l.b16 %v76
    %v358 = vunpack.c.l.b16 %v77
    %v359 = vunpack.c.l.b16 %v78
    %v360 = vunpack.c.l.b16 %v79
    %v361 = vunpack.c.l.b16 %v80
    %v362 = vunpack.c.l.b16 %v81
    %v363 = vunpack.c.l.b16 %v82
    %v364 = vunpack.c.l.b16 %v83
    %v365 = vunpack.c.l.b16 %v84
    %v366 = vunpack.c.l.b16 %v85
    %v367 = vunpack.c.l.b16 %v86
    %v368 = vunpack.c.l.b16 %v87
    %v369 = vunpack.c.l.b16 %v88
    %v370 = vunpack.c.l.b16 %v89
    %v371 = vunpack.c.l.b16 %v90
    %v372 = vunpack.c.l.b16 %v91
    %v373 = vunpack.c.l.b16 %v92
    %v374 = vunpack.c.l.b16 %v93
    %v375 = vunpack.c.l.b16 %v94
    %v376 = vunpack.c.l.b16 %v95
    %v377 = vunpack.c.l.b16 %v96
    %v378 = vunpack.c.l.b16 %v97
    %v379 = vunpack.c.l.b16 %v98
    %v380 = vunpack.c.l.b16 %v99
    %v381 = vunpack.c.l.b16 %v100
    %v382 = vunpack.c.l.b16 %v101
    %v383 = vunpack.c.l.b16 %v102
    %v384 = vunpack.c.l.b16 %v103
    %v385 = vunpack.c.l.b16 %v104
    %v386 = vunpack.c.l.b16 %v105
    %v387 = vunpack.c.l.b16 %v106
    %v388 = vunpack.c.l.b16 %v107
    %v389 = vunpack.c.l.b16 %v108
    %v390 = vunpack.c.l.b16 %v109
    %v391 = vunpack.c.l.b16 %v110
    %v392 = vunpack.c.l.b16 %v111
    %v393 = vunpack.c.l.b16 %v112
    %v394 = vunpack.c.l.b16 %v113
    %v395 = vunpack.c.l.b16 %v114
    %v396 = vunpack.c.l.b16 %v115
    %v397 = vunpack.c.l.b16 %v116
    %v398 = vunpack.c.l.b16 %v117
    %v399 = vunpack.c.l.b16 %v118
    %v400 = vunpack.c.l.b16 %v119
    %v401 = vunpack.c.l.b16 %v120
    %v402 = vunpack.c.l.b16 %v121
    %v403 = vunpack.c.l.b16 %v122
    %v404 = vunpack.c.l.b16 %v123
    %v405 = vunpack.c.l.b16 %v124
    %v406 = vunpack.c.l.b16 %v125
    %v407 = vunpack.c.l.b16 %v126
    %v408 = vunpack.c.l.b16 %v127
    %v409 = vunpack.c.l.b16 %v128
    %v410 = vunpack.c.l.b16 %v129
    %v411 = vunpack.c.l.b16 %v130
    %v412 = vunpack.c.l.b16 %v131
    %v413 = vunpack.c.l.b16 %v132
    %v414 = vunpack.c.l.b16 %v133
    %v415 = vunpack.c.l.b16 %v134
    %v416 = vunpack.c.l.b16 %v135
    %v417 = vunpack.c.l.b16 %v136
    %v418 = vunpack.c.l.b16 %v137
    %v419 = vunpack.c.l.b16 %v138
    %v420 = vunpack.c.l.b16 %v139
    %v421 = vunpack.c.l.b16 %v140
    %v422 = vunpack.c.l.b16 %v141
    %v423 = vunpack.c.l.b16 %v142
    %v424 = vunpack.c.l.b16 %v143
    %v425 = vunpack.c.l.b16 %v144
    %v426 = vunpack.c.l.b16 %v145
    %v427 = vunpack.c.l.b16 %v146
    %v428 = vunpack.c.l.b16 %v147
    %v429 = vunpack.c.l.b16 %v148
    %v430 = vunpack.c.l.b16 %v149
    %v431 = vunpack.c.l.b16 %v150
    %v432 = vunpack.c.l.b16 %v151
    %v433 = vunpack.c.l.b16 %v152
    %v434 = vunpack.c.l.b16 %v153
    %v435 = vunpack.c.l.b16 %v154
    %v436 = vunpack.c.l.b16 %v155
    %v437 = vunpack.c.l.b16 %v156
    %v438 = vunpack.c.l.b16 %v157
    %v439 = vunpack.c.l.b16 %v158
    %v440 = vunpack.c.l.b16 %v159
    %v441 = vunpack.c.l.b16 %v160
    %v442 = vpack.c.b16 %v315, %v314
    %v443 = vpack.c.b16 %v317, %v316
    %v444 = vpack.c.b16 %v319, %v318
    %v445 = vpack.c.b16 %v321, %v320
    %v446 = vpack.c.b16 %v323, %v322
    %v447 = vpack.c.b16 %v325, %v324
    %v448 = vpack.c.b16 %v327, %v326
    %v449 = vpack.c.b16 %v329, %v328
    %v450 = vpack.c.b16 %v331, %v330
    %v451 = vpack.c.b16 %v333, %v332
    %v452 = vpack.c.b16 %v335, %v334
    %v453 = vpack.c.b16 %v337, %v336
    %v454 = vpack.c.b16 %v339, %v338
    %v455 = vpack.c.b16 %v341, %v340
    %v456 = vpack.c.b16 %v343, %v342
    %v457 = vpack.c.b16 %v345, %v344
    %v458 = vpack.c.b16 %v347, %v346
    %v459 = vpack.c.b16 %v349, %v348
    %v460 = vpack.c.b16 %v351, %v350
    %v461 = vpack.c.b16 %v353, %v352
    %v462 = vpack.c.b16 %v355, %v354
    %v463 = vpack.c.b16 %v357, %v356
    %v464 = vpack.c.b16 %v359, %v358
    %v465 = vpack.c.b16 %v361, %v360
    %v466 = vpack.c.b16 %v363, %v362
    %v467 = vpack.c.b16 %v365, %v364
    %v468 = vpack.c.b16 %v367, %v366
    %v469 = vpack.c.b16 %v369, %v368
    %v470 = vpack.c.b16 %v371, %v370
    %v471 = vpack.c.b16 %v373, %v372
    %v472 = vpack.c.b16 %v375, %v374
    %v473 = vpack.c.b16 %v377, %v376
    %v474 = vpack.c.b16 %v379, %v378
    %v475 = vpack.c.b16 %v381, %v380
    %v476 = vpack.c.b16 %v383, %v382
    %v477 = vpack.c.b16 %v385, %v384
    %v478 = vpack.c.b16 %v387, %v386
    %v479 = vpack.c.b16 %v389, %v388
    %v480 = vpack.c.b16 %v391, %v390
    %v481 = vpack.c.b16 %v393, %v392
    %v482 = vpack.c.b16 %v395, %v394
    %v483 = vpack.c.b16 %v397, %v396
    %v484 = vpack.c.b16 %v399, %v398
    %v485 = vpack.c.b16 %v401, %v400
    %v486 = vpack.c.b16 %v403, %v402
    %v487 = vpack.c.b16 %v405, %v404
    %v488 = vpack.c.b16 %v407, %v406
    %v489 = vpack.c.b16 %v409, %v408
    %v490 = vpack.c.b16 %v411, %v410
    %v491 = vpack.c.b16 %v413, %v412
    %v492 = vpack.c.b16 %v415, %v414
    %v493 = vpack.c.b16 %v417, %v416
    %v494 = vpack.c.b16 %v419, %v418
    %v495 = vpack.c.b16 %v421, %v420
    %v496 = vpack.c.b16 %v423, %v422
    %v497 = vpack.c.b16 %v425, %v424
    %v498 = vpack.c.b16 %v427, %v426
    %v499 = vpack.c.b16 %v429, %v428
    %v500 = vpack.c.b16 %v431, %v430
    %v501 = vpack.c.b16 %v433, %v432
    %v502 = vpack.c.b16 %v435, %v434
    %v503 = vpack.c.b16 %v437, %v436
    %v504 = vpack.c.b16 %v439, %v438
    %v505 = vpack.c.b16 %v441, %v440
    %570 = vmatpush.bf16.msra.mxu0 %v449
    %571 = vmatpush.bf16.msra.mxu0 %v448
    %572 = vmatpush.bf16.msra.mxu0 %v447
    %573 = vmatpush.bf16.msra.mxu0 %v446
    %574 = vmatpush.bf16.msra.mxu0 %v445
    %575 = vmatpush.bf16.msra.mxu0 %v444
    %576 = vmatpush.bf16.msra.mxu0 %v443
    %577 = vmatpush.bf16.msra.mxu0 %v442
    %578 = vmatmul.bf16.gmra.mxu0 %v170
    %v579 = vpop.f32.mrf.mxu0
    %v580 = vadd.f32 %v163, %v579
    %v581 = vpop.f32.mrf.mxu0
    %582 = vdwg.mxu0
    %583 = vmatpush.bf16.msra.mxu0 %v457
    %584 = vmatpush.bf16.msra.mxu0 %v456
    %585 = vmatpush.bf16.msra.mxu0 %v455
    %586 = vmatpush.bf16.msra.mxu0 %v454
    %587 = vmatpush.bf16.msra.mxu0 %v453
    %588 = vmatpush.bf16.msra.mxu0 %v452
    %589 = vmatpush.bf16.msra.mxu0 %v451
    %590 = vmatpush.bf16.msra.mxu0 %v450
    %591 = vmatmul.bf16.gmra.mxu0 %v171
    %v592 = vpop.f32.mrf.mxu0
    %v593 = vadd.f32 %v580, %v592
    %v594 = vpop.f32.mrf.mxu0
    %595 = vdwg.mxu0
    %596 = vmatpush.bf16.msra.mxu0 %v465
    %597 = vmatpush.bf16.msra.mxu0 %v464
    %598 = vmatpush.bf16.msra.mxu0 %v463
    %599 = vmatpush.bf16.msra.mxu0 %v462
    %600 = vmatpush.bf16.msra.mxu0 %v461
    %601 = vmatpush.bf16.msra.mxu0 %v460
    %602 = vmatpush.bf16.msra.mxu0 %v459
    %603 = vmatpush.bf16.msra.mxu0 %v458
    %604 = vmatmul.bf16.gmra.mxu0 %v172
    %v605 = vpop.f32.mrf.mxu0
    %v606 = vadd.f32 %v593, %v605
    %v607 = vpop.f32.mrf.mxu0
    %608 = vdwg.mxu0
    %609 = vmatpush.bf16.msra.mxu0 %v473
    %610 = vmatpush.bf16.msra.mxu0 %v472
    %611 = vmatpush.bf16.msra.mxu0 %v471
    %612 = vmatpush.bf16.msra.mxu0 %v470
    %613 = vmatpush.bf16.msra.mxu0 %v469
    %614 = vmatpush.bf16.msra.mxu0 %v468
    %615 = vmatpush.bf16.msra.mxu0 %v467
    %616 = vmatpush.bf16.msra.mxu0 %v466
    %617 = vmatmul.bf16.gmra.mxu0 %v173
    %v618 = vpop.f32.mrf.mxu0
    %v619 = vadd.f32 %v606, %v618
    %v620 = vpop.f32.mrf.mxu0
    %621 = vdwg.mxu0
    %622 = vmatpush.bf16.msra.mxu0 %v481
    %623 = vmatpush.bf16.msra.mxu0 %v480
    %624 = vmatpush.bf16.msra.mxu0 %v479
    %625 = vmatpush.bf16.msra.mxu0 %v478
    %626 = vmatpush.bf16.msra.mxu0 %v477
    %627 = vmatpush.bf16.msra.mxu0 %v476
    %628 = vmatpush.bf16.msra.mxu0 %v475
    %629 = vmatpush.bf16.msra.mxu0 %v474
    %630 = vmatmul.bf16.gmra.mxu0 %v174
    %v631 = vpop.f32.mrf.mxu0
    %v632 = vadd.f32 %v619, %v631
    %v633 = vpop.f32.mrf.mxu0
    %634 = vdwg.mxu0
    %635 = vmatpush.bf16.msra.mxu0 %v489
    %636 = vmatpush.bf16.msra.mxu0 %v488
    %637 = vmatpush.bf16.msra.mxu0 %v487
    %638 = vmatpush.bf16.msra.mxu0 %v486
    %639 = vmatpush.bf16.msra.mxu0 %v485
    %640 = vmatpush.bf16.msra.mxu0 %v484
    %641 = vmatpush.bf16.msra.mxu0 %v483
    %642 = vmatpush.bf16.msra.mxu0 %v482
    %643 = vmatmul.bf16.gmra.mxu0 %v175
    %v644 = vpop.f32.mrf.mxu0
    %v645 = vadd.f32 %v632, %v644
    %v646 = vpop.f32.mrf.mxu0
    %647 = vdwg.mxu0
    %648 = vmatpush.bf16.msra.mxu0 %v497
    %649 = vmatpush.bf16.msra.mxu0 %v496
    %650 = vmatpush.bf16.msra.mxu0 %v495
    %651 = vmatpush.bf16.msra.mxu0 %v494
    %652 = vmatpush.bf16.msra.mxu0 %v493
    %653 = vmatpush.bf16.msra.mxu0 %v492
    %654 = vmatpush.bf16.msra.mxu0 %v491
    %655 = vmatpush.bf16.msra.mxu0 %v490
    %656 = vmatmul.bf16.gmra.mxu0 %v176
    %v657 = vpop.f32.mrf.mxu0
    %v658 = vadd.f32 %v645, %v657
    %v659 = vpop.f32.mrf.mxu0
    %660 = vdwg.mxu0
    %661 = vmatpush.bf16.msra.mxu0 %v505
    %662 = vmatpush.bf16.msra.mxu0 %v504
    %663 = vmatpush.bf16.msra.mxu0 %v503
    %664 = vmatpush.bf16.msra.mxu0 %v502
    %665 = vmatpush.bf16.msra.mxu0 %v501
    %666 = vmatpush.bf16.msra.mxu0 %v500
    %667 = vmatpush.bf16.msra.mxu0 %v499
    %668 = vmatpush.bf16.msra.mxu0 %v498
    %669 = vmatmul.bf16.gmra.mxu0 %v177
    %v670 = vpop.f32.mrf.mxu0
    %v671 = vadd.f32 %v658, %v670
    %v672 = vpop.f32.mrf.mxu0
    %673 = vdwg.mxu0
    %v674 = vmax.f32 %v671, 0.0
    %v675 = vpack.c.bf16 %v674, %v674
    %v676 = vld [vmem:[%s3] sm:$0xff]
    %v677 = vld [vmem:[%s3 + $0x8] sm:$0xff]
    %v678 = vld [vmem:[%s3 + $0x10] sm:$0xff]
    %v679 = vld [vmem:[%s3 + $0x18] sm:$0xff]
    %v680 = vld [vmem:[%s3 + $0x20] sm:$0xff]
    %v681 = vld [vmem:[%s3 + $0x28] sm:$0xff]
    %v682 = vld [vmem:[%s3 + $0x30] sm:$0xff]
    %v683 = vld [vmem:[%s3 + $0x38] sm:$0xff]
    %v684 = vld [vmem:[%s4] sm:$0x3]
    %v686 = vperm.slane %v684, 0
    %v687 = vperm.slane %v684, 1
    %v698 = vunpack.c.l.b16 %v676
    %v699 = vunpack.c.h.b16 %v676
    %v700 = vunpack.c.l.b16 %v677
    %v701 = vunpack.c.h.b16 %v677
    %v702 = vunpack.c.l.b16 %v678
    %v703 = vunpack.c.h.b16 %v678
    %v704 = vunpack.c.l.b16 %v679
    %v705 = vunpack.c.h.b16 %v679
    %v706 = vunpack.c.l.b16 %v680
    %v707 = vunpack.c.h.b16 %v680
    %v708 = vunpack.c.l.b16 %v681
    %v709 = vunpack.c.h.b16 %v681
    %v710 = vunpack.c.l.b16 %v682
    %v711 = vunpack.c.h.b16 %v682
    %v712 = vunpack.c.l.b16 %v683
    %v713 = vunpack.c.h.b16 %v683
    %v714 = vpack.c.b16 %v700, %v698
    %v715 = vpack.c.b16 %v701, %v699
    %v716 = vpack.c.b16 %v704, %v702
    %v717 = vpack.c.b16 %v705, %v703
    %v718 = vpack.c.b16 %v708, %v706
    %v719 = vpack.c.b16 %v709, %v707
    %v720 = vpack.c.b16 %v712, %v710
    %v721 = vpack.c.b16 %v713, %v711
    %vm730 = vcmask 523264
    %v732 = vsel %vm730, %v675, 0
    %734 = vmatpush.bf16.msra.mxu0 0
    %735 = vmatpush.bf16.msra.mxu0 0
    %736 = vmatpush.bf16.msra.mxu0 0
    %737 = vmatpush.bf16.msra.mxu0 0
    %738 = vmatpush.bf16.msra.mxu0 %v720
    %739 = vmatpush.bf16.msra.mxu0 %v718
    %740 = vmatpush.bf16.msra.mxu0 %v716
    %741 = vmatpush.bf16.msra.mxu0 %v714
    %742 = vmatmul.bf16.gmra.mxu0 %v732
    %v743 = vpop.f32.mrf.mxu0
    %v744 = vadd.f32 %v686, %v743
    %v745 = vpop.f32.mrf.mxu0
    %746 = vdwg.mxu0
    %747 = vmatpush.bf16.msra.mxu0 0
    %748 = vmatpush.bf16.msra.mxu0 0
    %749 = vmatpush.bf16.msra.mxu0 0
    %750 = vmatpush.bf16.msra.mxu0 0
    %751 = vmatpush.bf16.msra.mxu0 %v721
    %752 = vmatpush.bf16.msra.mxu0 %v719
    %753 = vmatpush.bf16.msra.mxu0 %v717
    %754 = vmatpush.bf16.msra.mxu0 %v715
    %755 = vmatmul.bf16.gmra.mxu0 %v732
    %v756 = vpop.f32.mrf.mxu0
    %v757 = vadd.f32 %v687, %v756
    %v758 = vpop.f32.mrf.mxu0
    %759 = vdwg.mxu0
    %v760 = vmax.f32 %v744, 0.0
    %v761 = vmax.f32 %v757, 0.0
    %v762 = vld [vmem:[%s5] sm:$0xf]
    %v763 = vld [vmem:[%s5 + $0x4] sm:$0xf]
    %v764 = vld [vmem:[%s5 + $0x8] sm:$0xf]
    %v765 = vld [vmem:[%s5 + $0xc] sm:$0xf]
    %v766 = vld [vmem:[%s5 + $0x10] sm:$0xf]
    %v767 = vld [vmem:[%s5 + $0x14] sm:$0xf]
    %v768 = vld [vmem:[%s5 + $0x18] sm:$0xf]
    %v769 = vld [vmem:[%s5 + $0x1c] sm:$0xf]
    %v770 = vld [vmem:[%s5 + $0x20] sm:$0xf]
    %v771 = vld [vmem:[%s5 + $0x24] sm:$0xf]
    %v772 = vld [vmem:[%s5 + $0x28] sm:$0xf]
    %v773 = vld [vmem:[%s5 + $0x2c] sm:$0xf]
    %v774 = vld [vmem:[%s5 + $0x30] sm:$0xf]
    %v775 = vld [vmem:[%s5 + $0x34] sm:$0xf]
    %v776 = vld [vmem:[%s5 + $0x38] sm:$0xf]
    %v777 = vld [vmem:[%s5 + $0x3c] sm:$0xf]
    %v778 = vld [vmem:[%s6] sm:$0x1]
    %v779 = vpack.c.bf16 %v760, %v760
    %v781 = vperm.slane %v778, 0
    %v799 = vunpack.c.l.b16 %v762
    %v800 = vunpack.c.l.b16 %v763
    %v801 = vunpack.c.l.b16 %v764
    %v802 = vunpack.c.l.b16 %v765
    %v803 = vunpack.c.l.b16 %v766
    %v804 = vunpack.c.l.b16 %v767
    %v805 = vunpack.c.l.b16 %v768
    %v806 = vunpack.c.l.b16 %v769
    %v807 = vunpack.c.l.b16 %v770
    %v808 = vunpack.c.l.b16 %v771
    %v809 = vunpack.c.l.b16 %v772
    %v810 = vunpack.c.l.b16 %v773
    %v811 = vunpack.c.l.b16 %v774
    %v812 = vunpack.c.l.b16 %v775
    %v813 = vunpack.c.l.b16 %v776
    %v814 = vunpack.c.l.b16 %v777
    %v815 = vpack.c.b16 %v800, %v799
    %v816 = vpack.c.b16 %v802, %v801
    %v817 = vpack.c.b16 %v804, %v803
    %v818 = vpack.c.b16 %v806, %v805
    %v819 = vpack.c.b16 %v808, %v807
    %v820 = vpack.c.b16 %v810, %v809
    %v821 = vpack.c.b16 %v812, %v811
    %v822 = vpack.c.b16 %v814, %v813
    %831 = vmatpush.bf16.msra.mxu0 %v822
    %832 = vmatpush.bf16.msra.mxu0 %v821
    %833 = vmatpush.bf16.msra.mxu0 %v820
    %834 = vmatpush.bf16.msra.mxu0 %v819
    %835 = vmatpush.bf16.msra.mxu0 %v818
    %836 = vmatpush.bf16.msra.mxu0 %v817
    %837 = vmatpush.bf16.msra.mxu0 %v816
    %838 = vmatpush.bf16.msra.mxu0 %v815
    %839 = vmatmul.bf16.gmra.mxu0 %v779
    %v840 = vpop.f32.mrf.mxu0
    %v841 = vadd.f32 %v781, %v840
    %v842 = vpop.f32.mrf.mxu0
    %843 = vdwg.mxu0
    %v844 = vld [vmem:[%s7] sm:$0x3]
    %vm845 = vcmp.gt.f32.partialorder %v844, 0.0
    %847 = vrot.lane.b32.xlu0 %v841, 126
    %v848 = vpop.permute.xlu0 %847
    %v850 = vsel %vm845, %v848, -1e+30
    %v851 = vpack.c.bf16 %v761, %v761
    %v853 = vrot.slane %v851, 1
    %855 = vmatpush.bf16.msra.mxu0 %v822
    %856 = vmatpush.bf16.msra.mxu0 %v821
    %857 = vmatpush.bf16.msra.mxu0 %v820
    %858 = vmatpush.bf16.msra.mxu0 %v819
    %859 = vmatpush.bf16.msra.mxu0 %v818
    %860 = vmatpush.bf16.msra.mxu0 %v817
    %861 = vmatpush.bf16.msra.mxu0 %v816
    %862 = vmatpush.bf16.msra.mxu0 %v815
    %863 = vmatmul.bf16.gmra.mxu0 %v853
    %v864 = vpop.f32.mrf.mxu0
    %v865 = vadd.f32 %v781, %v864
    %v866 = vpop.f32.mrf.mxu0
    %867 = vdwg.mxu0
    %869 = vrot.lane.b32.xlu0 %v865, 127
    %v870 = vpop.permute.xlu0 %869
    %v872 = vsel %vm845, %v870, -1e+30
    %874 = vrot.lane.b32.xlu0 %v872, 127
    %v875 = vpop.permute.xlu0 %874
    %v877 = vmax.f32 %v850, %v875
    %v878 = vsub.f32 %v850, %v877
    %v879 = vmul.f32 %v878, 1.442695
    %v880 = vpow.pop %v879
    %882 = vrot.lane.b32.xlu0 %v877, 1
    %v883 = vpop.permute.xlu0 %882
    %v885 = vsub.f32 %v872, %v883
    %v886 = vmul.f32 %v885, 1.442695
    %v887 = vpow.pop %v886
    %889 = vrot.lane.b32.xlu0 %v887, 127
    %v890 = vpop.permute.xlu0 %889
    %v892 = vadd.f32 %v880, %v890
    %v893 = vrcp.pop %v892
    %v894 = vmul.f32 %v880, %v893
    %896 = vset.pattern.permute.xlu0 0
    %897 = vperm.xlu0 %896, %v894
    %v898 = vpop.permute.xlu0 %897
    %v900 = vmul.f32 %v898, %v841
    %902 = vrot.lane.b32.xlu0 %v893, 1
    %v903 = vpop.permute.xlu0 %902
    %v905 = vmul.f32 %v887, %v903
    %907 = vset.pattern.permute.xlu0 1
    %908 = vperm.xlu0 %907, %v905
    %v909 = vpop.permute.xlu0 %908
    %v911 = vmul.f32 %v909, %v865
    %v912 = vadd.f32 %v900, %v911
    %913 = vst [vmem:[#allocation2] sm:$0x3] %v912
    // Predicated region
    $region34: #{tpu_custom_call.1} parent=1 // pred_check
      _
    $region35: #{tpu_custom_call.1} parent=1 // pred_check_branch
      %915 = sbr.rel (0) target = $region37
    $region36: #{tpu_custom_call.1} parent=1 // pred_region
      %917 = vsyncadd [#allocation3], 0
      %s919 = sshll.u32 [#allocation2], 4
      %s920 = int_to_ptr.vmem [resolvable:$true] %s919
      %s921 = sshll.u32 %s8, 4
      %s922 = int_to_ptr.hbm [resolvable:$true] %s921
      %924 = dma.vmem_to_hbm [thread:$0]  %s920, 32, %s922, [#allocation3]
    $region37: #{tpu_custom_call.1} parent=1 // pred_fallthru
      _
    // Predicated region
    $region38: #{tpu_custom_call.1} parent=1 // pred_check
      _
    $region39: #{tpu_custom_call.1} parent=1 // pred_check_branch
      %926 = sbr.rel (0) target = $region41
    $region40: #{tpu_custom_call.1} parent=1 // pred_region
      %928 = dma.done [#allocation3], 32
    $region41: #{tpu_custom_call.1} parent=1 // pred_fallthru
      _
    %929 = vsyncpa [#allocation3], 1

</llo_original>
